<compile_context>
chip_gen: v6e
topology: v6e:2x2x1
jax: 0.10.0
libtpu: 0.0.40
codegen_flags: <defaults>
</compile_context>

<pallas_src>
import functools

import jax
import jax.numpy as jnp
from jax.experimental import pallas as pl
from jax.experimental.pallas import tpu as pltpu

IDX_IGNORE = 0


def _tce_kernel(ids_ref, pred_ref, out_ref, *, idx_ignore: int, seq_len: int,
                tile_s: int):
    """One (batch row, seq tile): partial sum of masked per-token CE.

    ids_ref : (1, TS, 1) int32     target token ids (tail padded = idx_ignore)
    pred_ref: (1, TS, V) f32/bf16  logits (rows past seq_len may be garbage)
    out_ref : (1, 1, 8, 1) f32     tile partial sum, broadcast over sublanes
    """
    t = pl.program_id(1)
    p = pred_ref[...]                                   # (1, TS, V) input dtype
    ids = ids_ref[...]                                  # (1, TS, 1) int32
    _, ts, v = p.shape

    # Sweep 1 over the vocab: per-token max (numerical stabilization).
    pmax = jnp.max(p, axis=-1, keepdims=True)           # (1, TS, 1)

    # Sweep 2: shifted logits feed both the exp-sum and the one-hot pick.
    # Kept in the input dtype (bf16 VALU/EUP on v6e/v7x); accumulators are f32.
    s = p - pmax                                        # (1, TS, V)
    vocab_iota = jax.lax.broadcasted_iota(jnp.int32, (1, ts, v), 2)
    onehot = vocab_iota == ids                          # (1, TS, V) bool
    picked_shifted = jnp.sum(jnp.where(onehot, s, 0), axis=-1, keepdims=True,
                             dtype=jnp.float32)         # (1, TS, 1) f32, exact
    sumexp = jnp.sum(jnp.exp(s), axis=-1, keepdims=True,
                     dtype=jnp.float32)                 # (1, TS, 1) f32

    # pmax cancels:  lse - picked == log(sumexp) - (picked - pmax)
    ce = jnp.log(sumexp) - picked_shifted               # (1, TS, 1) f32

    # Valid token = not the ignored token AND inside the real sequence.
    # jnp.where (select, not multiply) drops NaN/inf from garbage tail rows.
    pos = jax.lax.broadcasted_iota(jnp.int32, (1, ts, 1), 1) + t * tile_s
    valid = jnp.logical_and(ids != idx_ignore, pos < seq_len)
    masked = jnp.where(valid, ce, 0.0)                  # (1, TS, 1) f32

    tile_sum = jnp.sum(masked, axis=1, keepdims=True)   # (1, 1, 1)
    out_ref[...] = jnp.broadcast_to(tile_sum[..., None], (1, 1, 8, 1))


def _pick_tile_s(S: int, V: int, itemsize: int, B: int):
    """Seq-tile size + VMEM limit, generation-aware.

    v5e/v6e (128 MiB VMEM): ~16 MiB blocks, 64 MiB limit.
    v7x (64 MiB VMEM/TC):   ~6 MiB blocks, 40 MiB limit (also the fallback).
    """
    align = {4: 8, 2: 16, 1: 32}.get(itemsize, 8)
    try:
        vmem_cap = int(pltpu.get_tpu_info().vmem_capacity_bytes)
    except Exception:
        vmem_cap = 64 * 1024 * 1024                     # conservative (v7x-like)
    if vmem_cap >= 96 * 1024 * 1024:                    # v5e / v6e
        target_bytes = 16 * 1024 * 1024
        vmem_limit = 64 * 1024 * 1024
    else:                                               # v7x
        target_bytes = 6 * 1024 * 1024
        vmem_limit = 40 * 1024 * 1024

    row_bytes = max(1, V * itemsize)
    max_rows = max(align, (target_bytes // row_bytes) // align * align)
    s_ceil = -(-S // align) * align
    ts = max(align, min(s_ceil, max_rows))
    ts = (ts // align) * align

    # v7x megacore: guarantee >= 2 parallel grid cells per chip when possible.
    if B * (-(-S // ts)) < 2 and S > align:
        half = -(-((S + 1) // 2) // align) * align
        if -(-S // half) >= 2:
            ts = half
    return ts, vmem_limit


def tce_loss(target, predictions, idx_ignore: int = IDX_IGNORE):
    """Truncated cross-entropy; target/predictions are [B, S, V]."""
    B, S, V = predictions.shape
    itemsize = jnp.dtype(predictions.dtype).itemsize

    # Cheap preprocessing in JAX: the dense one-hot target never enters the
    # kernel (ids + per-row counts only).
    ids = jnp.argmax(target, axis=-1).astype(jnp.int32)                 # [B, S]
    count = jnp.sum(ids != idx_ignore, axis=1).astype(jnp.float32)      # [B]

    ts, vmem_limit = _pick_tile_s(S, V, itemsize, B)
    num_t = pl.cdiv(S, ts)
    S_pad = num_t * ts
    if S_pad != S:
        # Only the tiny int32 id array is padded; the logits are NOT copied —
        # the ragged last tile is masked inside the kernel.
        ids = jnp.pad(ids, ((0, 0), (0, S_pad - S)), constant_values=idx_ignore)
    ids3 = ids[..., None]                                               # [B, S_pad, 1]

    kernel = functools.partial(_tce_kernel, idx_ignore=idx_ignore,
                               seq_len=S, tile_s=ts)

    ce_part = pl.pallas_call(
        kernel,
        out_shape=jax.ShapeDtypeStruct((B, num_t, 8, 1), jnp.float32),
        grid_spec=pltpu.PrefetchScalarGridSpec(
            num_scalar_prefetch=0,
            grid=(B, num_t),
            in_specs=[
                pl.BlockSpec((1, ts, 1), lambda b, t: (b, t, 0)),   # token ids
                pl.BlockSpec((1, ts, V), lambda b, t: (b, t, 0)),   # logits
            ],
            out_specs=pl.BlockSpec((1, 1, 8, 1), lambda b, t: (b, t, 0, 0)),
        ),
        compiler_params=pltpu.CompilerParams(
            dimension_semantics=("parallel", "parallel"),
            vmem_limit_bytes=vmem_limit,
        ),
        cost_estimate=pl.CostEstimate(
            flops=5 * B * S * V,
            transcendentals=B * S * V,
            bytes_accessed=B * S * V * itemsize + B * S_pad * 4 + B * num_t * 32,
        ),
    )(ids3, predictions)

    # Finalize with full-row counts (correct across seq tiles).
    per_b = jnp.sum(ce_part[:, :, 0, 0], axis=1)                        # [B]
    # NOTE: rows with zero valid tokens contribute 0 here (PyTorch would nan).
    weighted = jnp.where(count > 0.0, per_b / count, 0.0)
    return jnp.sum(weighted) / B


def _tce_ref(target, predictions, idx_ignore: int = IDX_IGNORE):
    """Pure-JAX reference mirroring the PyTorch forward."""
    B = predictions.shape[0]
    one_hot = jnp.argmax(target, axis=-1)
    mask = (one_hot != idx_ignore).astype(jnp.float32)
    count = jnp.sum(mask, axis=1)
    lse = jax.nn.logsumexp(predictions, axis=-1)
    picked = jnp.take_along_axis(predictions, one_hot[..., None], axis=-1)[..., 0]
    ce = lse - picked
    per_b = jnp.sum(ce * mask, axis=1)
    weighted = jnp.where(count > 0, per_b / count, 0.0)
    return jnp.sum(weighted) / B


if __name__ == "__main__":
    key = jax.random.PRNGKey(0)
    B, S, V = 2, 8, 32

    k_idx, k_pred, k_nop = jax.random.split(key, 3)
    # Random target token indices; force some positions to the ignored token.
    tok_idx = jax.random.randint(k_idx, (B, S), 0, V)
    nop_mask = jax.random.bernoulli(k_nop, p=0.3, shape=(B, S))
    tok_idx = jnp.where(nop_mask, IDX_IGNORE, tok_idx)
    target = jax.nn.one_hot(tok_idx, V, dtype=jnp.float32)            # [B, S, V]
    predictions = jax.random.normal(k_pred, (B, S, V), dtype=jnp.float32)

    loss = tce_loss(target, predictions)
    jax.block_until_ready(loss)

    ref = _tce_ref(target, predictions)
    assert jnp.allclose(loss, ref, rtol=1e-5, atol=1e-5), (loss, ref)

    print("KERNEL_OK")
</pallas_src>

<mosaic_0001>
module attributes {stable_mosaic.version = 11 : i64} {
  func.func @_tce_kernel(%arg0: i32, %arg1: i32, %arg2: memref<1x8x1xi32, #tpu.memory_space<vmem>>, %arg3: memref<1x8x32xf32, #tpu.memory_space<vmem>>, %arg4: memref<1x1x8x1xf32, #tpu.memory_space<vmem>>) attributes {dimension_semantics = [#tpu.dimension_semantics<parallel>, #tpu.dimension_semantics<parallel>], iteration_bounds = array<i64: 2, 1>, scalar_prefetch = 0 : i64, scratch_operands = 0 : i64, tpu.core_type = #tpu.core_type<tc>, window_params = [{transform_indices = @transform_0, window_bounds = array<i64: 1, 8, 1>}, {transform_indices = @transform_1, window_bounds = array<i64: 1, 8, 32>}, {transform_indices = @transform_2, window_bounds = array<i64: 1, 1, 8, 1>}]} {
    %c0 = arith.constant 0 : index
    %c0_0 = arith.constant 0 : index
    %c0_1 = arith.constant 0 : index
    %0 = vector.load %arg3[%c0, %c0_0, %c0_1] : memref<1x8x32xf32, #tpu.memory_space<vmem>>, vector<1x8x32xf32>
    %c0_2 = arith.constant 0 : index
    %c0_3 = arith.constant 0 : index
    %c0_4 = arith.constant 0 : index
    %1 = vector.load %arg2[%c0_2, %c0_3, %c0_4] : memref<1x8x1xi32, #tpu.memory_space<vmem>>, vector<1x8x1xi32>
    %cst = arith.constant dense<0xFF800000> : vector<1x8xf32>
    %2 = vector.multi_reduction <maximumf>, %0, %cst [2] : vector<1x8x32xf32> to vector<1x8xf32>
    %3 = vector.shape_cast %2 : vector<1x8xf32> to vector<1x8x1xf32>
    %4 = vector.broadcast %3 : vector<1x8x1xf32> to vector<1x8x32xf32>
    %5 = arith.subf %0, %4 : vector<1x8x32xf32>
    %6 = tpu.iota {dimensions = array<i32: 2>} : vector<1x8x32xi32>
    %7 = vector.broadcast %1 : vector<1x8x1xi32> to vector<1x8x32xi32>
    %8 = arith.cmpi eq, %6, %7 : vector<1x8x32xi32>
    %c0_i32 = arith.constant 0 : i32
    %9 = arith.sitofp %c0_i32 : i32 to f32
    %10 = vector.broadcast %9 : f32 to vector<1x8x32xf32>
    %11 = arith.select %8, %5, %10 : vector<1x8x32xi1>, vector<1x8x32xf32>
    %cst_5 = arith.constant dense<0.000000e+00> : vector<1x8xf32>
    %12 = vector.multi_reduction <add>, %11, %cst_5 [2] : vector<1x8x32xf32> to vector<1x8xf32>
    %13 = vector.shape_cast %12 : vector<1x8xf32> to vector<1x8x1xf32>
    %14 = math.exp %5 : vector<1x8x32xf32>
    %cst_6 = arith.constant dense<0.000000e+00> : vector<1x8xf32>
    %15 = vector.multi_reduction <add>, %14, %cst_6 [2] : vector<1x8x32xf32> to vector<1x8xf32>
    %16 = vector.shape_cast %15 : vector<1x8xf32> to vector<1x8x1xf32>
    %17 = math.log %16 : vector<1x8x1xf32>
    %18 = arith.subf %17, %13 : vector<1x8x1xf32>
    %19 = tpu.iota {dimensions = array<i32: 1>} : vector<1x8x1xi32>
    %c8_i32 = arith.constant 8 : i32
    %20 = arith.muli %arg1, %c8_i32 : i32
    %21 = vector.broadcast %20 : i32 to vector<1x8x1xi32>
    %22 = arith.addi %19, %21 : vector<1x8x1xi32>
    %c0_i32_7 = arith.constant 0 : i32
    %23 = vector.broadcast %c0_i32_7 : i32 to vector<1x8x1xi32>
    %24 = arith.cmpi ne, %1, %23 : vector<1x8x1xi32>
    %c8_i32_8 = arith.constant 8 : i32
    %25 = vector.broadcast %c8_i32_8 : i32 to vector<1x8x1xi32>
    %26 = arith.cmpi slt, %22, %25 : vector<1x8x1xi32>
    %27 = arith.andi %24, %26 : vector<1x8x1xi1>
    %cst_9 = arith.constant 0.000000e+00 : f32
    %28 = vector.broadcast %cst_9 : f32 to vector<1x8x1xf32>
    %29 = arith.select %27, %18, %28 : vector<1x8x1xi1>, vector<1x8x1xf32>
    %cst_10 = arith.constant dense<0.000000e+00> : vector<1x1xf32>
    %30 = vector.multi_reduction <add>, %29, %cst_10 [1] : vector<1x8x1xf32> to vector<1x1xf32>
    %31 = vector.shape_cast %30 : vector<1x1xf32> to vector<1x1x1xf32>
    %32 = vector.shape_cast %31 : vector<1x1x1xf32> to vector<1x1x1x1xf32>
    %33 = vector.shape_cast %32 : vector<1x1x1x1xf32> to vector<1x1x1x1xf32>
    %34 = vector.broadcast %33 : vector<1x1x1x1xf32> to vector<1x1x8x1xf32>
    %c0_11 = arith.constant 0 : index
    %c0_12 = arith.constant 0 : index
    %c0_13 = arith.constant 0 : index
    %c0_14 = arith.constant 0 : index
    %35 = vector.load %arg4[%c0_11, %c0_12, %c0_13, %c0_14] : memref<1x1x8x1xf32, #tpu.memory_space<vmem>>, vector<1x1x8x1xf32>
    tpu.vector_store %arg4[%c0_11, %c0_12, %c0_13, %c0_14], %34 {strides = array<i32>} : memref<1x1x8x1xf32, #tpu.memory_space<vmem>>, vector<1x1x8x1xf32>,
    return
  }
  func.func @transform_0(%arg0: i32, %arg1: i32) -> (i32, i32, i32) {
    %c0_i32 = arith.constant 0 : i32
    %c0_i32_0 = arith.constant 0 : i32
    return %arg0, %arg1, %c0_i32 : i32, i32, i32
  }
  func.func @transform_1(%arg0: i32, %arg1: i32) -> (i32, i32, i32) {
    %c0_i32 = arith.constant 0 : i32
    %c0_i32_0 = arith.constant 0 : i32
    return %arg0, %arg1, %c0_i32 : i32, i32, i32
  }
  func.func @transform_2(%arg0: i32, %arg1: i32) -> (i32, i32, i32, i32) {
    %c0_i32 = arith.constant 0 : i32
    %c0_i32_0 = arith.constant 0 : i32
    %c0_i32_1 = arith.constant 0 : i32
    return %arg0, %arg1, %c0_i32, %c0_i32_0 : i32, i32, i32, i32
  }
}

</mosaic_0001>

<llo_original>
// kernel: tpu_custom_call.1
$region0: #{tpu_custom_call.1}
  #allocation0 [shape = 'u32[]', space=smem, size = 0x4, offset = 0x4, fixed_abs, tag = 'smem constant byte address 0x4 - core index']
  #allocation1 [shape = 'u32[144,128]{1,0:T(1,128)}', space=vmem, size = 0x12000, scoped, tag = 'internal scratch']
  %s0 = inlined_call_operand.vmem [shape: s32[2,8,1], index: 0, kind: input, shape index: {}]
  %s1 = inlined_call_operand.vmem [shape: f32[2,8,32], index: 1, kind: input, shape index: {}]
  %s2 = inlined_call_operand.vmem [shape: f32[2,1,8,1], index: 2, kind: output, shape index: {}]
  %s3 = sld [smem:[#allocation0]]
  $region41: #{tpu_custom_call.1} parent=0
    _
  %s5 = ssub.s32 1, %s3
  %s6 = scalar_select 0, %s5, %s3
  loop: start=0, step=1, limit=4
  $region2: #{tpu_custom_call.1} parent=0 // loop_pre_header
    _
  $region3: #{tpu_custom_call.1} parent=0 // loop_header
    %s8 = sphi 0, %s12
    %p9 = scmp.ge.s32.totalorder %s8, 4
    %s15 = sphi 0, %s27
    %s16 = sphi 0, %s23
    %s17 = sphi 0, %s15
    %s18 = sphi 0, %s16
    %s19 = sphi 0, %s17
    %s20 = sphi 0, %s18
    %s32 = sphi 0, %s34
    %s35 = sphi 0, %s32
    %s36 = sphi 0, %s35
    %s52 = sphi 0, %s36
    %s60 = sphi 0, %s62
    %s63 = sphi 0, %s60
    %s64 = sphi 0, %s63
    %s80 = sphi 0, %s64
    %s88 = sphi 0, %s90
    %s91 = sphi 0, %s88
    %s92 = sphi 0, %s91
    %s108 = sphi 0, %s92
  $region4: #{tpu_custom_call.1} parent=0 // loop_header_branch
    %11 = sbr.rel (%p9) target = $region8
  $region5: #{tpu_custom_call.1} parent=0 // loop_body
    %s13 = ssub.s32 %s8, 1
    %s14 = ssub.s32 %s8, 2
    %s21 = sadd.s32 1, %s16
    %p22 = scmp.ge.s32.totalorder %s21, 1
    %s23 = scalar_select %p22, 0, %s21
    %s24 = sadd.s32 1, %s15
    %s25 = scalar_select %p22, %s24, %s15
    %p26 = scmp.ge.s32.totalorder %s25, 2
    %s27 = scalar_select %p26, 0, %s25
    %s28 = ssub.s32 %s15, %s27
    %s29 = ssub.s32 %s16, %s23
    %s30 = sor.u32 %s28, %s29
    %p31 = scmp.eq.s32.totalorder %s30, 0
    %s33 = sadd.s32 %s32, 1
    %s34 = scalar_select %p31, %s32, %s33
    %p37 = pneg %p31
    %p38 = scmp.eq.s32.totalorder %s8, 1
    %p39 = por %p37, %p38
    %p40 = scmp.ne.s32.totalorder %s32, %s35
    %p41 = scmp.eq.s32.totalorder %s8, 0
    %p42 = por %p40, %p41
    %p43 = scmp.ne.s32.totalorder %s32, %s35
    %p44 = scmp.eq.s32.totalorder %s13, 1
    %p45 = por %p43, %p44
    %p46 = scmp.ne.s32.totalorder %s35, %s36
    %p47 = scmp.eq.s32.totalorder %s13, 0
    %p48 = por %p46, %p47
    %p49 = scmp.ne.s32.totalorder %s35, %s36
    %p50 = scmp.eq.s32.totalorder %s14, 1
    %p51 = por %p49, %p50
    %p53 = scmp.ne.s32.totalorder %s36, %s52
    %p54 = scmp.eq.s32.totalorder %s14, 0
    %p55 = por %p53, %p54
    %s56 = ssub.s32 %s15, %s27
    %s57 = ssub.s32 %s16, %s23
    %s58 = sor.u32 %s56, %s57
    %p59 = scmp.eq.s32.totalorder %s58, 0
    %s61 = sadd.s32 %s60, 1
    %s62 = scalar_select %p59, %s60, %s61
    %p65 = pneg %p59
    %p66 = scmp.eq.s32.totalorder %s8, 1
    %p67 = por %p65, %p66
    %p68 = scmp.ne.s32.totalorder %s60, %s63
    %p69 = scmp.eq.s32.totalorder %s8, 0
    %p70 = por %p68, %p69
    %p71 = scmp.ne.s32.totalorder %s60, %s63
    %p72 = scmp.eq.s32.totalorder %s13, 1
    %p73 = por %p71, %p72
    %p74 = scmp.ne.s32.totalorder %s63, %s64
    %p75 = scmp.eq.s32.totalorder %s13, 0
    %p76 = por %p74, %p75
    %p77 = scmp.ne.s32.totalorder %s63, %s64
    %p78 = scmp.eq.s32.totalorder %s14, 1
    %p79 = por %p77, %p78
    %p81 = scmp.ne.s32.totalorder %s64, %s80
    %p82 = scmp.eq.s32.totalorder %s14, 0
    %p83 = por %p81, %p82
    %s84 = ssub.s32 %s15, %s27
    %s85 = ssub.s32 %s16, %s23
    %s86 = sor.u32 %s84, %s85
    %p87 = scmp.eq.s32.totalorder %s86, 0
    %s89 = sadd.s32 %s88, 1
    %s90 = scalar_select %p87, %s88, %s89
    %p93 = pneg %p87
    %p94 = scmp.eq.s32.totalorder %s8, 1
    %p95 = por %p93, %p94
    %p96 = scmp.ne.s32.totalorder %s88, %s91
    %p97 = scmp.eq.s32.totalorder %s8, 0
    %p98 = por %p96, %p97
    %p99 = scmp.ne.s32.totalorder %s88, %s91
    %p100 = scmp.eq.s32.totalorder %s13, 1
    %p101 = por %p99, %p100
    %p102 = scmp.ne.s32.totalorder %s91, %s92
    %p103 = scmp.eq.s32.totalorder %s13, 0
    %p104 = por %p102, %p103
    %p105 = scmp.ne.s32.totalorder %s91, %s92
    %p106 = scmp.eq.s32.totalorder %s14, 1
    %p107 = por %p105, %p106
    %p109 = scmp.ne.s32.totalorder %s92, %s108
    %p110 = scmp.eq.s32.totalorder %s14, 0
    %p111 = por %p109, %p110
    %p112 = scmp.le.s32.totalorder 1, %s8
    %p113 = scmp.lt.s32.totalorder %s8, 3
    %p114 = pnand %p112, %p113
    %p115 = pneg %p114
    // Predicated region
    $region9: #{tpu_custom_call.1} parent=5 // pred_check
      _
    $region10: #{tpu_custom_call.1} parent=5 // pred_check_branch
      %117 = sbr.rel (%p114) target = $region12
    $region11: #{tpu_custom_call.1} parent=5 // pred_region
      %s118 = ssub.s32 %s8, 1
    $region12: #{tpu_custom_call.1} parent=5 // pred_fallthru
      _
    %p119 = scmp.lt.s32.totalorder %s8, 2
    // Predicated region
    $region13: #{tpu_custom_call.1} parent=5 // pred_check
      %p120 = pneg %p119
    $region14: #{tpu_custom_call.1} parent=5 // pred_check_branch
      %122 = sbr.rel (%p120) target = $region16
    $region15: #{tpu_custom_call.1} parent=5 // pred_region
      // Predicated region
      $region17: #{tpu_custom_call.1} parent=15 // pred_check
        %p123 = pneg %p42
      $region18: #{tpu_custom_call.1} parent=15 // pred_check_branch
        %125 = sbr.rel (%p123) target = $region20
      $region19: #{tpu_custom_call.1} parent=15 // pred_region
        %p126 = scmp.lt.s32.totalorder %s15, 1
        %s127 = scalar_select %p126, %s15, 1
        %p128 = scmp.lt.s32.totalorder %s16, 0
        %s129 = scalar_select %p128, %s16, 0
        %s130 = sadd.s32 %s129, %s127
        %s131 = smul.addr %s130, 8
        %s132 = scalar_lea.vmem %s0, %s131
      $region20: #{tpu_custom_call.1} parent=15 // pred_fallthru
        _
      // Predicated region
      $region21: #{tpu_custom_call.1} parent=15 // pred_check
        %p133 = pneg %p70
      $region22: #{tpu_custom_call.1} parent=15 // pred_check_branch
        %135 = sbr.rel (%p133) target = $region24
      $region23: #{tpu_custom_call.1} parent=15 // pred_region
        %p136 = scmp.lt.s32.totalorder %s15, 1
        %s137 = scalar_select %p136, %s15, 1
        %p138 = scmp.lt.s32.totalorder %s16, 0
        %s139 = scalar_select %p138, %s16, 0
        %s140 = sadd.s32 %s139, %s137
        %s141 = smul.addr %s140, 8
        %s142 = scalar_lea.vmem %s1, %s141
      $region24: #{tpu_custom_call.1} parent=15 // pred_fallthru
        _
    $region16: #{tpu_custom_call.1} parent=5 // pred_fallthru
      _
    %p143 = scmp.le.s32.totalorder 1, %s8
    %p144 = scmp.lt.s32.totalorder %s8, 3
    %p145 = pnand %p143, %p144
    %p146 = pneg %p145
    // Predicated region
    $region25: #{tpu_custom_call.1} parent=5 // pred_check
      _
    $region26: #{tpu_custom_call.1} parent=5 // pred_check_branch
      %148 = sbr.rel (%p145) target = $region28
    $region27: #{tpu_custom_call.1} parent=5 // pred_region
      %s149 = ssub.s32 %s8, 1
      %p150 = scmp.lt.s32.totalorder %s17, 1
      %s151 = scalar_select %p150, %s17, 1
      %p152 = scmp.lt.s32.totalorder %s18, 0
      %s153 = scalar_select %p152, %s18, 0
      %s154 = sadd.s32 %s153, %s151
      %s155 = smul.addr %s154, 8
      %s156 = scalar_lea.vmem %s0, %s155
      %p157 = pneg %p48
      %p158 = pneg %p45
      %p159 = scmp.lt.s32.totalorder %s17, 1
      %s160 = scalar_select %p159, %s17, 1
      %p161 = scmp.lt.s32.totalorder %s18, 0
      %s162 = scalar_select %p161, %s18, 0
      %s163 = sadd.s32 %s162, %s160
      %s164 = smul.addr %s163, 8
      %s165 = scalar_lea.vmem %s1, %s164
      %p166 = pneg %p76
      %p167 = pneg %p73
      %p168 = pneg %p104
      %p169 = pneg %p101
      %p170 = scmp.lt.s32.totalorder %s17, 1
      %s171 = scalar_select %p170, %s17, 1
      %p172 = scmp.lt.s32.totalorder %s18, 0
      %s173 = scalar_select %p172, %s18, 0
      %s174 = sadd.s32 %s173, %s171
      %s175 = smul.addr %s174, 8
      %s176 = scalar_lea.vmem %s2, %s175
      %p177 = scmp.lt.s32.totalorder %s17, 1
      %s178 = scalar_select %p177, %s17, 1
      %p179 = scmp.lt.s32.totalorder %s18, 0
      %s180 = scalar_select %p179, %s18, 0
      %s181 = sadd.s32 %s180, %s178
      %s182 = smul.addr %s181, 8
      %s183 = scalar_lea.vmem %s0, %s182
      %p184 = scmp.lt.s32.totalorder %s17, 1
      %s185 = scalar_select %p184, %s17, 1
      %p186 = scmp.lt.s32.totalorder %s18, 0
      %s187 = scalar_select %p186, %s18, 0
      %s188 = sadd.s32 %s187, %s185
      %s189 = smul.addr %s188, 8
      %s190 = scalar_lea.vmem %s1, %s189
      %p191 = scmp.lt.s32.totalorder %s17, 1
      %s192 = scalar_select %p191, %s17, 1
      %p193 = scmp.lt.s32.totalorder %s18, 0
      %s194 = scalar_select %p193, %s18, 0
      %s195 = sadd.s32 %s194, %s192
      %s196 = smul.addr %s195, 8
      %s197 = scalar_lea.vmem %s2, %s196
      %v198 = vld [vmem:[%s190] sm:$0xff]
      %v199 = vld [vmem:[%s183] sm:$0xff]
      %vm200 = vcmask 261120
      %v201 = vsel %vm200, %v198, -inf
      %202 = vmax.xlane.f32.xlu0 %v201
      %v203 = vpop.xlane.xlu0 %202
      %v204 = vsub.f32 %v198, %v203
      %v205 = vlaneseq
      %v206 = vand.u32 %v205, 127
      %207 = vset.pattern.permute.xlu0 0
      %208 = vperm.xlu0 %207, %v199
      %v209 = vpop.permute.xlu0 %208
      %vm210 = vcmp.eq.s32.totalorder %v206, %v209
      %v211 = vsel %vm210, %v204, 0.0
      %v212 = vsel %vm200, %v211, 0.0
      %213 = vadd.xlane.f32.xlu0 %v212
      %v214 = vpop.xlane.xlu0 %213
      %v215 = vmul.f32 %v204, 1.442695
      %v216 = vpow.pop %v215
      %v217 = vsel %vm200, %v216, 0.0
      %218 = vadd.xlane.f32.xlu0 %v217
      %v219 = vpop.xlane.xlu0 %218
      %v220 = vlog2.pop %v219
      %v221 = vmul.f32 %v220, 0.6931472
      %v222 = vsub.f32 %v221, %v214
      %v223 = vlaneseq
      %v224 = vshrl.u32 %v223, 7
      %s225 = smul.u32 %s18, 8
      %v226 = vstv %s225
      %v227 = vadd.s32 %v224, %v226
      %vm228 = vcmp.ne.s32.totalorder %v199, 0
      %vm229 = vcmp.lt.s32.totalorder %v227, 8
      %vm230 = vmand %vm228, %vm229
      %v231 = vsel %vm230, %v222, 0.0
      %vm232 = vcmask 7168
      %v233 = vsel %vm232, %v231, 0.0
      %v234 = vrot.slane %v233, 4
      %v235 = vadd.f32 %v233, %v234
      %v236 = vrot.slane %v235, 2
      %v237 = vadd.f32 %v235, %v236
      %v238 = vrot.slane %v237, 1
      %v239 = vadd.f32 %v237, %v238
      %240 = vst.msk [vmem:[%s197] sm:$0xff] %vm232, %v239
      %p241 = scmp.lt.s32.totalorder %s17, 1
      %s242 = scalar_select %p241, %s17, 1
      %p243 = scmp.lt.s32.totalorder %s18, 0
      %s244 = scalar_select %p243, %s18, 0
      %s245 = sadd.s32 %s244, %s242
      %s246 = smul.addr %s245, 8
      %s247 = scalar_lea.vmem %s2, %s246
      // Predicated region
      $region29: #{tpu_custom_call.1} parent=27 // pred_check
        %p248 = pneg %p101
      $region30: #{tpu_custom_call.1} parent=27 // pred_check_branch
        %250 = sbr.rel (%p248) target = $region32
      $region31: #{tpu_custom_call.1} parent=27 // pred_region
        _
      $region32: #{tpu_custom_call.1} parent=27 // pred_fallthru
        _
    $region28: #{tpu_custom_call.1} parent=5 // pred_fallthru
      _
    %p251 = scmp.le.s32.totalorder 2, %s8
    // Predicated region
    $region33: #{tpu_custom_call.1} parent=5 // pred_check
      %p252 = pneg %p251
    $region34: #{tpu_custom_call.1} parent=5 // pred_check_branch
      %254 = sbr.rel (%p252) target = $region36
    $region35: #{tpu_custom_call.1} parent=5 // pred_region
      %s255 = ssub.s32 %s8, 2
      // Predicated region
      $region37: #{tpu_custom_call.1} parent=35 // pred_check
        %p256 = pneg %p107
      $region38: #{tpu_custom_call.1} parent=35 // pred_check_branch
        %258 = sbr.rel (%p256) target = $region40
      $region39: #{tpu_custom_call.1} parent=35 // pred_region
        %p259 = scmp.lt.s32.totalorder %s19, 1
        %s260 = scalar_select %p259, %s19, 1
        %p261 = scmp.lt.s32.totalorder %s20, 0
        %s262 = scalar_select %p261, %s20, 0
        %s263 = sadd.s32 %s262, %s260
        %s264 = smul.addr %s263, 8
        %s265 = scalar_lea.vmem %s2, %s264
      $region40: #{tpu_custom_call.1} parent=35 // pred_fallthru
        _
    $region36: #{tpu_custom_call.1} parent=5 // pred_fallthru
      _
  $region6: #{tpu_custom_call.1} parent=0 // loop_footer
    %s12 = sadd.s32 1, %s8
  $region7: #{tpu_custom_call.1} parent=0 // loop_footer_branch
    %7 = sbr.rel target = $region3
  $region8: #{tpu_custom_call.1} parent=0 // loop_exit
    _

</llo_original>
